<compile_context>
chip_gen: v7x
topology: tpu7x:2x2x1
jax: 0.10.0
libtpu: 0.0.40
codegen_flags: <defaults>
</compile_context>

<pallas_src>
import math

import jax
import jax.numpy as jnp
from jax.experimental import pallas as pl
from jax.experimental.pallas import tpu as pltpu


def _round_up(x, m):
    return (x + m - 1) // m * m


def block_head_kernel(q_ref, k_ref, v_ref, w1t_ref, w2t_ref, pp_ref, out_ref):
    TB, T, D = k_ref.shape
    Dff = w1t_ref.shape[1]
    scale = 1.0 / math.sqrt(D)

    q = q_ref[...].astype(jnp.float32)                       # (TB, D) f32

    # ---- attention scores: per-t VPU multiply + lane (XLU) reduce.  T is a small
    #      trace-time constant, so a static unrolled loop keeps the live set tiny
    #      and avoids a length-TB loop of 1-row MXU pushes. ----
    cols = []
    for t in range(T):
        kt = k_ref[:, t, :].astype(jnp.float32)              # (TB, D)
        cols.append(jnp.sum(q * kt, axis=-1, keepdims=True))  # (TB, 1)
    scores = jnp.concatenate(cols, axis=-1) * scale           # (TB, T) f32

    # softmax over T (exact reciprocal — this kernel is mem-bound, the divide is free)
    m = jnp.max(scores, axis=-1, keepdims=True)
    e = jnp.exp(scores - m)
    p = e / jnp.sum(e, axis=-1, keepdims=True)                # (TB, T)

    # ---- A = sum_t p[:, t] * v[:, t, :]  (VPU madd chain over T) ----
    A = jnp.zeros((TB, D), jnp.float32)
    for t in range(T):
        A = A + p[:, t:t + 1] * v_ref[:, t, :].astype(jnp.float32)

    # ---- coalesced small parameters: one (8, D) slab ----
    pp = pp_ref[...].astype(jnp.float32)
    a1 = pp[0:1, :]          # norm1 alpha
    g1 = pp[1:2, :]          # norm1 bias
    a2 = pp[2:3, :]          # norm2 alpha
    g2 = pp[3:4, :]          # norm2 bias
    b2 = pp[4:5, :]          # linear_2 bias (D)
    b1 = pp[5:6, :Dff]       # linear_1 bias (Dff, zero-padded to D in the slab)

    eps = 1e-6

    def norm(x, alpha, bias):
        mu = jnp.mean(x, axis=-1, keepdims=True)
        c = x - mu
        # torch.Tensor.std default is unbiased (divide by D-1)
        var = jnp.sum(c * c, axis=-1, keepdims=True) * (1.0 / (D - 1))
        return alpha * (c / (jnp.sqrt(var) + eps)) + bias     # exact reciprocal

    q_ = norm(A + q, a1, g1)                                  # (TB, D) f32

    # ---- feed-forward (weights passed pre-transposed: x @ W^T == x @ Wt) ----
    w1t = w1t_ref[...]                                        # (D, Dff) storage dtype
    w2t = w2t_ref[...]                                        # (Dff, D) storage dtype
    h = jnp.dot(q_.astype(w1t.dtype), w1t,
                preferred_element_type=jnp.float32) + b1
    h = jnp.maximum(h, 0.0)
    ff = jnp.dot(h.astype(w2t.dtype), w2t,
                 preferred_element_type=jnp.float32) + b2

    out = norm(q_ + ff, a2, g2)
    out_ref[...] = out.astype(out_ref.dtype)


def block_head_forward(q, k, v, params, *, block_b=128):
    """q: (B, D), k/v: (B, T, D) in any storage dtype. Returns (B, D) float32."""
    B, T, D = k.shape
    Dff = params["w1"].shape[0]
    assert Dff <= D, "param slab packs the linear_1 bias into a D-wide row"
    assert q.shape == (B, D)

    # Batch tile: multiple of 8 sublanes, capped by block_b and by a VMEM budget for
    # the double-buffered k+v tiles (2 arrays x 2 buffers x TB x T x D x itemsize).
    kv_row_bytes = 2 * 2 * T * D * k.dtype.itemsize
    max_tb_vmem = max(8, ((24 * 1024 * 1024) // kv_row_bytes) // 8 * 8)
    TB = min(block_b, _round_up(B, 8), max_tb_vmem)
    # v7x megacore: keep >= 2 grid steps when the batch allows it, so the "parallel"
    # axis actually shards across both TensorCores (no effect on v5e/v6e).
    if B > 8 and pl.cdiv(B, TB) < 2:
        TB = max(8, _round_up((B + 1) // 2, 8))
    grid = (pl.cdiv(B, TB),)

    # Coalesce the six small per-feature parameter vectors into one (8, D) slab.
    slab = jnp.zeros((8, D), jnp.float32)
    slab = slab.at[0].set(params["alpha1"].astype(jnp.float32))
    slab = slab.at[1].set(params["bias1"].astype(jnp.float32))
    slab = slab.at[2].set(params["alpha2"].astype(jnp.float32))
    slab = slab.at[3].set(params["bias2"].astype(jnp.float32))
    slab = slab.at[4].set(params["b2"].astype(jnp.float32))
    slab = slab.at[5, :Dff].set(params["b1"].astype(jnp.float32))

    w1t = params["w1"].T          # (D, Dff), kept in storage dtype
    w2t = params["w2"].T          # (Dff, D), kept in storage dtype

    out = pl.pallas_call(
        block_head_kernel,
        out_shape=jax.ShapeDtypeStruct((B, D), jnp.float32),
        grid=grid,
        in_specs=[
            pl.BlockSpec((TB, D), lambda b: (b, 0)),        # q   : batch-tiled
            pl.BlockSpec((TB, T, D), lambda b: (b, 0, 0)),  # k   : batch-tiled
            pl.BlockSpec((TB, T, D), lambda b: (b, 0, 0)),  # v   : batch-tiled
            pl.BlockSpec((D, Dff), lambda b: (0, 0)),       # w1t : resident
            pl.BlockSpec((Dff, D), lambda b: (0, 0)),       # w2t : resident
            pl.BlockSpec((8, D), lambda b: (0, 0)),         # param slab: resident
        ],
        out_specs=pl.BlockSpec((TB, D), lambda b: (b, 0)),
        compiler_params=pltpu.CompilerParams(
            dimension_semantics=("parallel",),
            vmem_limit_bytes=48 * 1024 * 1024,   # <= v7x physical 64 MiB, ample on v5e/v6e
        ),
    )(q, k, v, w1t, w2t, slab)
    return out


def block_head_reference(q, k, v, params):
    """Pure-JAX reference mirroring the PyTorch module (eval mode)."""
    D = q.shape[-1]
    eps = 1e-6

    scores = jnp.sum(q[:, None, :] * k, axis=-1) / math.sqrt(D)
    p = jax.nn.softmax(scores, axis=-1)
    A = jnp.sum(p[:, :, None] * v, axis=1)

    def norm(x, alpha, bias):
        mu = jnp.mean(x, axis=-1, keepdims=True)
        std = jnp.std(x, axis=-1, keepdims=True, ddof=1)
        return alpha * (x - mu) / (std + eps) + bias

    q_ = norm(A + q, params["alpha1"], params["bias1"])
    h = jax.nn.relu(jnp.dot(q_, params["w1"].T,
                            precision=jax.lax.Precision.HIGHEST) + params["b1"])
    ff = jnp.dot(h, params["w2"].T,
                 precision=jax.lax.Precision.HIGHEST) + params["b2"]
    return norm(q_ + ff, params["alpha2"], params["bias2"])


def make_params(key, d_model):
    d_ff = d_model // 2
    k1, k2, k3, k4 = jax.random.split(key, 4)
    return {
        # FeedForward: nn.init.normal(std=0.001) on weights; small random biases
        "w1": 0.001 * jax.random.normal(k1, (d_ff, d_model), jnp.float32),
        "b1": 0.01 * jax.random.normal(k2, (d_ff,), jnp.float32),
        "w2": 0.001 * jax.random.normal(k3, (d_model, d_ff), jnp.float32),
        "b2": 0.01 * jax.random.normal(k4, (d_model,), jnp.float32),
        # Norm: alpha=ones, bias=zeros (as in __init__)
        "alpha1": jnp.ones((d_model,), jnp.float32),
        "bias1": jnp.zeros((d_model,), jnp.float32),
        "alpha2": jnp.ones((d_model,), jnp.float32),
        "bias2": jnp.zeros((d_model,), jnp.float32),
    }


if __name__ == "__main__":
    B, T, D = 16, 8, 64  # d_model = 64 (module default), small batch / time

    key = jax.random.PRNGKey(0)
    kq, kk, kv_, kp = jax.random.split(key, 4)
    q = jax.random.normal(kq, (B, D), jnp.float32)
    k = jax.random.normal(kk, (B, T, D), jnp.float32)
    v = jax.random.normal(kv_, (B, T, D), jnp.float32)
    params = make_params(kp, D)

    ref = block_head_reference(q, k, v, params)

    # 1) f32 inputs: exact-reciprocal norms/softmax -> near-f32 accuracy.
    out = jax.block_until_ready(block_head_forward(q, k, v, params))
    assert out.shape == (B, D)
    err = float(jnp.max(jnp.abs(out - ref)))
    assert jnp.allclose(out, ref, atol=1e-3, rtol=1e-3), f"f32 max abs err {err}"

    # 2) ragged batch (B not a multiple of the batch tile): no wrapper-side pad copy,
    #    Pallas handles the partial last block; garbage rows stay row-confined.
    Br = 12
    out_r = jax.block_until_ready(block_head_forward(q[:Br], k[:Br], v[:Br], params))
    assert out_r.shape == (Br, D)
    err_r = float(jnp.max(jnp.abs(out_r - ref[:Br])))
    assert jnp.allclose(out_r, ref[:Br], atol=1e-3, rtol=1e-3), (
        f"ragged max abs err {err_r}")

    # 3) bf16 k/v storage (halves the dominant HBM traffic); in-kernel math stays f32.
    #    Compare against the reference fed the same quantized k/v so only the kernel's
    #    own numerics are tested.
    k_bf = k.astype(jnp.bfloat16)
    v_bf = v.astype(jnp.bfloat16)
    out_bf = jax.block_until_ready(block_head_forward(q, k_bf, v_bf, params))
    ref_bf = block_head_reference(q, k_bf.astype(jnp.float32),
                                  v_bf.astype(jnp.float32), params)
    err_bf = float(jnp.max(jnp.abs(out_bf - ref_bf)))
    assert jnp.allclose(out_bf, ref_bf, atol=1e-3, rtol=1e-3), (
        f"bf16 max abs err {err_bf}")

    print("KERNEL_OK")
</pallas_src>

<mosaic_0001>
module attributes {stable_mosaic.version = 11 : i64} {
  func.func @block_head_kernel(%arg0: i32, %arg1: memref<8x64xf32, #tpu.memory_space<vmem>>, %arg2: memref<8x8x64xf32, #tpu.memory_space<vmem>>, %arg3: memref<8x8x64xf32, #tpu.memory_space<vmem>>, %arg4: memref<64x32xf32, #tpu.memory_space<vmem>>, %arg5: memref<32x64xf32, #tpu.memory_space<vmem>>, %arg6: memref<8x64xf32, #tpu.memory_space<vmem>>, %arg7: memref<8x64xf32, #tpu.memory_space<vmem>>) attributes {dimension_semantics = [#tpu.dimension_semantics<parallel>], iteration_bounds = array<i64: 2>, scalar_prefetch = 0 : i64, scratch_operands = 0 : i64, tpu.core_type = #tpu.core_type<tc>, window_params = [{transform_indices = @transform_0, window_bounds = array<i64: 8, 64>}, {transform_indices = @transform_1, window_bounds = array<i64: 8, 8, 64>}, {transform_indices = @transform_2, window_bounds = array<i64: 8, 8, 64>}, {pipeline_mode = #tpu.pipeline_mode<synchronous>, transform_indices = @transform_3, window_bounds = array<i64: 64, 32>}, {pipeline_mode = #tpu.pipeline_mode<synchronous>, transform_indices = @transform_4, window_bounds = array<i64: 32, 64>}, {pipeline_mode = #tpu.pipeline_mode<synchronous>, transform_indices = @transform_5, window_bounds = array<i64: 8, 64>}, {transform_indices = @transform_6, window_bounds = array<i64: 8, 64>}]} {
    %c0 = arith.constant 0 : index
    %c0_0 = arith.constant 0 : index
    %0 = vector.load %arg1[%c0, %c0_0] : memref<8x64xf32, #tpu.memory_space<vmem>>, vector<8x64xf32>
    %c0_1 = arith.constant 0 : index
    %c0_2 = arith.constant 0 : index
    %c0_3 = arith.constant 0 : index
    %1 = vector.load %arg2[%c0_1, %c0_2, %c0_3] : memref<8x8x64xf32, #tpu.memory_space<vmem>>, vector<8x1x64xf32>
    %2 = vector.shape_cast %1 : vector<8x1x64xf32> to vector<8x64xf32>
    %3 = arith.mulf %0, %2 : vector<8x64xf32>
    %cst = arith.constant dense<0.000000e+00> : vector<8xf32>
    %4 = vector.multi_reduction <add>, %3, %cst [1] : vector<8x64xf32> to vector<8xf32>
    %5 = vector.shape_cast %4 : vector<8xf32> to vector<8x1xf32>
    %c0_4 = arith.constant 0 : index
    %c1 = arith.constant 1 : index
    %c0_5 = arith.constant 0 : index
    %6 = vector.load %arg2[%c0_4, %c1, %c0_5] : memref<8x8x64xf32, #tpu.memory_space<vmem>>, vector<8x1x64xf32>
    %7 = vector.shape_cast %6 : vector<8x1x64xf32> to vector<8x64xf32>
    %8 = arith.mulf %0, %7 : vector<8x64xf32>
    %cst_6 = arith.constant dense<0.000000e+00> : vector<8xf32>
    %9 = vector.multi_reduction <add>, %8, %cst_6 [1] : vector<8x64xf32> to vector<8xf32>
    %10 = vector.shape_cast %9 : vector<8xf32> to vector<8x1xf32>
    %c0_7 = arith.constant 0 : index
    %c2 = arith.constant 2 : index
    %c0_8 = arith.constant 0 : index
    %11 = vector.load %arg2[%c0_7, %c2, %c0_8] : memref<8x8x64xf32, #tpu.memory_space<vmem>>, vector<8x1x64xf32>
    %12 = vector.shape_cast %11 : vector<8x1x64xf32> to vector<8x64xf32>
    %13 = arith.mulf %0, %12 : vector<8x64xf32>
    %cst_9 = arith.constant dense<0.000000e+00> : vector<8xf32>
    %14 = vector.multi_reduction <add>, %13, %cst_9 [1] : vector<8x64xf32> to vector<8xf32>
    %15 = vector.shape_cast %14 : vector<8xf32> to vector<8x1xf32>
    %c0_10 = arith.constant 0 : index
    %c3 = arith.constant 3 : index
    %c0_11 = arith.constant 0 : index
    %16 = vector.load %arg2[%c0_10, %c3, %c0_11] : memref<8x8x64xf32, #tpu.memory_space<vmem>>, vector<8x1x64xf32>
    %17 = vector.shape_cast %16 : vector<8x1x64xf32> to vector<8x64xf32>
    %18 = arith.mulf %0, %17 : vector<8x64xf32>
    %cst_12 = arith.constant dense<0.000000e+00> : vector<8xf32>
    %19 = vector.multi_reduction <add>, %18, %cst_12 [1] : vector<8x64xf32> to vector<8xf32>
    %20 = vector.shape_cast %19 : vector<8xf32> to vector<8x1xf32>
    %c0_13 = arith.constant 0 : index
    %c4 = arith.constant 4 : index
    %c0_14 = arith.constant 0 : index
    %21 = vector.load %arg2[%c0_13, %c4, %c0_14] : memref<8x8x64xf32, #tpu.memory_space<vmem>>, vector<8x1x64xf32>
    %22 = vector.shape_cast %21 : vector<8x1x64xf32> to vector<8x64xf32>
    %23 = arith.mulf %0, %22 : vector<8x64xf32>
    %cst_15 = arith.constant dense<0.000000e+00> : vector<8xf32>
    %24 = vector.multi_reduction <add>, %23, %cst_15 [1] : vector<8x64xf32> to vector<8xf32>
    %25 = vector.shape_cast %24 : vector<8xf32> to vector<8x1xf32>
    %c0_16 = arith.constant 0 : index
    %c5 = arith.constant 5 : index
    %c0_17 = arith.constant 0 : index
    %26 = vector.load %arg2[%c0_16, %c5, %c0_17] : memref<8x8x64xf32, #tpu.memory_space<vmem>>, vector<8x1x64xf32>
    %27 = vector.shape_cast %26 : vector<8x1x64xf32> to vector<8x64xf32>
    %28 = arith.mulf %0, %27 : vector<8x64xf32>
    %cst_18 = arith.constant dense<0.000000e+00> : vector<8xf32>
    %29 = vector.multi_reduction <add>, %28, %cst_18 [1] : vector<8x64xf32> to vector<8xf32>
    %30 = vector.shape_cast %29 : vector<8xf32> to vector<8x1xf32>
    %c0_19 = arith.constant 0 : index
    %c6 = arith.constant 6 : index
    %c0_20 = arith.constant 0 : index
    %31 = vector.load %arg2[%c0_19, %c6, %c0_20] : memref<8x8x64xf32, #tpu.memory_space<vmem>>, vector<8x1x64xf32>
    %32 = vector.shape_cast %31 : vector<8x1x64xf32> to vector<8x64xf32>
    %33 = arith.mulf %0, %32 : vector<8x64xf32>
    %cst_21 = arith.constant dense<0.000000e+00> : vector<8xf32>
    %34 = vector.multi_reduction <add>, %33, %cst_21 [1] : vector<8x64xf32> to vector<8xf32>
    %35 = vector.shape_cast %34 : vector<8xf32> to vector<8x1xf32>
    %c0_22 = arith.constant 0 : index
    %c7 = arith.constant 7 : index
    %c0_23 = arith.constant 0 : index
    %36 = vector.load %arg2[%c0_22, %c7, %c0_23] : memref<8x8x64xf32, #tpu.memory_space<vmem>>, vector<8x1x64xf32>
    %37 = vector.shape_cast %36 : vector<8x1x64xf32> to vector<8x64xf32>
    %38 = arith.mulf %0, %37 : vector<8x64xf32>
    %cst_24 = arith.constant dense<0.000000e+00> : vector<8xf32>
    %39 = vector.multi_reduction <add>, %38, %cst_24 [1] : vector<8x64xf32> to vector<8xf32>
    %40 = vector.shape_cast %39 : vector<8xf32> to vector<8x1xf32>
    %41 = tpu.concatenate %5, %10, %15, %20, %25, %30, %35, %40 in 1 : vector<8x1xf32>, vector<8x1xf32>, vector<8x1xf32>, vector<8x1xf32>, vector<8x1xf32>, vector<8x1xf32>, vector<8x1xf32>, vector<8x1xf32> -> vector<8x8xf32>
    %cst_25 = arith.constant 1.250000e-01 : f32
    %42 = vector.broadcast %cst_25 : f32 to vector<8x8xf32>
    %43 = arith.mulf %41, %42 : vector<8x8xf32>
    %cst_26 = arith.constant dense<0xFF800000> : vector<8xf32>
    %44 = vector.multi_reduction <maximumf>, %43, %cst_26 [1] : vector<8x8xf32> to vector<8xf32>
    %45 = vector.shape_cast %44 : vector<8xf32> to vector<8x1xf32>
    %46 = vector.broadcast %45 : vector<8x1xf32> to vector<8x8xf32>
    %47 = arith.subf %43, %46 : vector<8x8xf32>
    %48 = math.exp %47 : vector<8x8xf32>
    %cst_27 = arith.constant dense<0.000000e+00> : vector<8xf32>
    %49 = vector.multi_reduction <add>, %48, %cst_27 [1] : vector<8x8xf32> to vector<8xf32>
    %50 = vector.shape_cast %49 : vector<8xf32> to vector<8x1xf32>
    %51 = vector.broadcast %50 : vector<8x1xf32> to vector<8x8xf32>
    %52 = arith.divf %48, %51 : vector<8x8xf32>
    %cst_28 = arith.constant 0.000000e+00 : f32
    %53 = vector.broadcast %cst_28 : f32 to vector<8x64xf32>
    %54 = vector.extract_strided_slice %52 {offsets = [0, 0], sizes = [8, 1], strides = [1, 1]} : vector<8x8xf32> to vector<8x1xf32>
    %c0_29 = arith.constant 0 : index
    %c0_30 = arith.constant 0 : index
    %c0_31 = arith.constant 0 : index
    %55 = vector.load %arg3[%c0_29, %c0_30, %c0_31] : memref<8x8x64xf32, #tpu.memory_space<vmem>>, vector<8x1x64xf32>
    %56 = vector.shape_cast %55 : vector<8x1x64xf32> to vector<8x64xf32>
    %57 = vector.broadcast %54 : vector<8x1xf32> to vector<8x64xf32>
    %58 = arith.mulf %57, %56 : vector<8x64xf32>
    %59 = arith.addf %53, %58 : vector<8x64xf32>
    %60 = vector.extract_strided_slice %52 {offsets = [0, 1], sizes = [8, 1], strides = [1, 1]} : vector<8x8xf32> to vector<8x1xf32>
    %c0_32 = arith.constant 0 : index
    %c1_33 = arith.constant 1 : index
    %c0_34 = arith.constant 0 : index
    %61 = vector.load %arg3[%c0_32, %c1_33, %c0_34] : memref<8x8x64xf32, #tpu.memory_space<vmem>>, vector<8x1x64xf32>
    %62 = vector.shape_cast %61 : vector<8x1x64xf32> to vector<8x64xf32>
    %63 = vector.broadcast %60 : vector<8x1xf32> to vector<8x64xf32>
    %64 = arith.mulf %63, %62 : vector<8x64xf32>
    %65 = arith.addf %59, %64 : vector<8x64xf32>
    %66 = vector.extract_strided_slice %52 {offsets = [0, 2], sizes = [8, 1], strides = [1, 1]} : vector<8x8xf32> to vector<8x1xf32>
    %c0_35 = arith.constant 0 : index
    %c2_36 = arith.constant 2 : index
    %c0_37 = arith.constant 0 : index
    %67 = vector.load %arg3[%c0_35, %c2_36, %c0_37] : memref<8x8x64xf32, #tpu.memory_space<vmem>>, vector<8x1x64xf32>
    %68 = vector.shape_cast %67 : vector<8x1x64xf32> to vector<8x64xf32>
    %69 = vector.broadcast %66 : vector<8x1xf32> to vector<8x64xf32>
    %70 = arith.mulf %69, %68 : vector<8x64xf32>
    %71 = arith.addf %65, %70 : vector<8x64xf32>
    %72 = vector.extract_strided_slice %52 {offsets = [0, 3], sizes = [8, 1], strides = [1, 1]} : vector<8x8xf32> to vector<8x1xf32>
    %c0_38 = arith.constant 0 : index
    %c3_39 = arith.constant 3 : index
    %c0_40 = arith.constant 0 : index
    %73 = vector.load %arg3[%c0_38, %c3_39, %c0_40] : memref<8x8x64xf32, #tpu.memory_space<vmem>>, vector<8x1x64xf32>
    %74 = vector.shape_cast %73 : vector<8x1x64xf32> to vector<8x64xf32>
    %75 = vector.broadcast %72 : vector<8x1xf32> to vector<8x64xf32>
    %76 = arith.mulf %75, %74 : vector<8x64xf32>
    %77 = arith.addf %71, %76 : vector<8x64xf32>
    %78 = vector.extract_strided_slice %52 {offsets = [0, 4], sizes = [8, 1], strides = [1, 1]} : vector<8x8xf32> to vector<8x1xf32>
    %c0_41 = arith.constant 0 : index
    %c4_42 = arith.constant 4 : index
    %c0_43 = arith.constant 0 : index
    %79 = vector.load %arg3[%c0_41, %c4_42, %c0_43] : memref<8x8x64xf32, #tpu.memory_space<vmem>>, vector<8x1x64xf32>
    %80 = vector.shape_cast %79 : vector<8x1x64xf32> to vector<8x64xf32>
    %81 = vector.broadcast %78 : vector<8x1xf32> to vector<8x64xf32>
    %82 = arith.mulf %81, %80 : vector<8x64xf32>
    %83 = arith.addf %77, %82 : vector<8x64xf32>
    %84 = vector.extract_strided_slice %52 {offsets = [0, 5], sizes = [8, 1], strides = [1, 1]} : vector<8x8xf32> to vector<8x1xf32>
    %c0_44 = arith.constant 0 : index
    %c5_45 = arith.constant 5 : index
    %c0_46 = arith.constant 0 : index
    %85 = vector.load %arg3[%c0_44, %c5_45, %c0_46] : memref<8x8x64xf32, #tpu.memory_space<vmem>>, vector<8x1x64xf32>
    %86 = vector.shape_cast %85 : vector<8x1x64xf32> to vector<8x64xf32>
    %87 = vector.broadcast %84 : vector<8x1xf32> to vector<8x64xf32>
    %88 = arith.mulf %87, %86 : vector<8x64xf32>
    %89 = arith.addf %83, %88 : vector<8x64xf32>
    %90 = vector.extract_strided_slice %52 {offsets = [0, 6], sizes = [8, 1], strides = [1, 1]} : vector<8x8xf32> to vector<8x1xf32>
    %c0_47 = arith.constant 0 : index
    %c6_48 = arith.constant 6 : index
    %c0_49 = arith.constant 0 : index
    %91 = vector.load %arg3[%c0_47, %c6_48, %c0_49] : memref<8x8x64xf32, #tpu.memory_space<vmem>>, vector<8x1x64xf32>
    %92 = vector.shape_cast %91 : vector<8x1x64xf32> to vector<8x64xf32>
    %93 = vector.broadcast %90 : vector<8x1xf32> to vector<8x64xf32>
    %94 = arith.mulf %93, %92 : vector<8x64xf32>
    %95 = arith.addf %89, %94 : vector<8x64xf32>
    %96 = vector.extract_strided_slice %52 {offsets = [0, 7], sizes = [8, 1], strides = [1, 1]} : vector<8x8xf32> to vector<8x1xf32>
    %c0_50 = arith.constant 0 : index
    %c7_51 = arith.constant 7 : index
    %c0_52 = arith.constant 0 : index
    %97 = vector.load %arg3[%c0_50, %c7_51, %c0_52] : memref<8x8x64xf32, #tpu.memory_space<vmem>>, vector<8x1x64xf32>
    %98 = vector.shape_cast %97 : vector<8x1x64xf32> to vector<8x64xf32>
    %99 = vector.broadcast %96 : vector<8x1xf32> to vector<8x64xf32>
    %100 = arith.mulf %99, %98 : vector<8x64xf32>
    %101 = arith.addf %95, %100 : vector<8x64xf32>
    %c0_53 = arith.constant 0 : index
    %c0_54 = arith.constant 0 : index
    %102 = vector.load %arg6[%c0_53, %c0_54] : memref<8x64xf32, #tpu.memory_space<vmem>>, vector<8x64xf32>
    %103 = vector.extract_strided_slice %102 {offsets = [0, 0], sizes = [1, 64], strides = [1, 1]} : vector<8x64xf32> to vector<1x64xf32>
    %104 = vector.extract_strided_slice %102 {offsets = [1, 0], sizes = [1, 64], strides = [1, 1]} : vector<8x64xf32> to vector<1x64xf32>
    %105 = vector.extract_strided_slice %102 {offsets = [2, 0], sizes = [1, 64], strides = [1, 1]} : vector<8x64xf32> to vector<1x64xf32>
    %106 = vector.extract_strided_slice %102 {offsets = [3, 0], sizes = [1, 64], strides = [1, 1]} : vector<8x64xf32> to vector<1x64xf32>
    %107 = vector.extract_strided_slice %102 {offsets = [4, 0], sizes = [1, 64], strides = [1, 1]} : vector<8x64xf32> to vector<1x64xf32>
    %108 = vector.extract_strided_slice %102 {offsets = [5, 0], sizes = [1, 32], strides = [1, 1]} : vector<8x64xf32> to vector<1x32xf32>
    %109 = arith.addf %101, %0 : vector<8x64xf32>
    %cst_55 = arith.constant dense<0.000000e+00> : vector<8xf32>
    %110 = vector.multi_reduction <add>, %109, %cst_55 [1] : vector<8x64xf32> to vector<8xf32>
    %111 = vector.shape_cast %110 : vector<8xf32> to vector<8x1xf32>
    %cst_56 = arith.constant 6.400000e+01 : f32
    %112 = vector.broadcast %cst_56 : f32 to vector<8x1xf32>
    %113 = arith.divf %111, %112 : vector<8x1xf32>
    %114 = vector.broadcast %113 : vector<8x1xf32> to vector<8x64xf32>
    %115 = arith.subf %109, %114 : vector<8x64xf32>
    %116 = arith.mulf %115, %115 : vector<8x64xf32>
    %cst_57 = arith.constant dense<0.000000e+00> : vector<8xf32>
    %117 = vector.multi_reduction <add>, %116, %cst_57 [1] : vector<8x64xf32> to vector<8xf32>
    %118 = vector.shape_cast %117 : vector<8xf32> to vector<8x1xf32>
    %cst_58 = arith.constant 0.0158730168 : f32
    %119 = vector.broadcast %cst_58 : f32 to vector<8x1xf32>
    %120 = arith.mulf %118, %119 : vector<8x1xf32>
    %121 = math.sqrt %120 : vector<8x1xf32>
    %cst_59 = arith.constant 9.99999997E-7 : f32
    %122 = vector.broadcast %cst_59 : f32 to vector<8x1xf32>
    %123 = arith.addf %121, %122 : vector<8x1xf32>
    %124 = vector.broadcast %123 : vector<8x1xf32> to vector<8x64xf32>
    %125 = arith.divf %115, %124 : vector<8x64xf32>
    %126 = vector.broadcast %103 : vector<1x64xf32> to vector<8x64xf32>
    %127 = arith.mulf %126, %125 : vector<8x64xf32>
    %128 = vector.broadcast %104 : vector<1x64xf32> to vector<8x64xf32>
    %129 = arith.addf %127, %128 : vector<8x64xf32>
    %c0_60 = arith.constant 0 : index
    %c0_61 = arith.constant 0 : index
    %130 = vector.load %arg4[%c0_60, %c0_61] : memref<64x32xf32, #tpu.memory_space<vmem>>, vector<64x32xf32>
    %c0_62 = arith.constant 0 : index
    %c0_63 = arith.constant 0 : index
    %131 = vector.load %arg5[%c0_62, %c0_63] : memref<32x64xf32, #tpu.memory_space<vmem>>, vector<32x64xf32>
    %cst_64 = arith.constant dense<0.000000e+00> : vector<8x32xf32>
    %132 = tpu.matmul %129, %130, %cst_64 {dimension_numbers = #tpu.dot_dimension_numbers<[1], [0], [0], [1], [0, 0, 1, 1], [], []>} : vector<8x64xf32>, vector<64x32xf32>, vector<8x32xf32> -> vector<8x32xf32>
    %133 = vector.broadcast %108 : vector<1x32xf32> to vector<8x32xf32>
    %134 = arith.addf %132, %133 : vector<8x32xf32>
    %cst_65 = arith.constant 0.000000e+00 : f32
    %135 = vector.broadcast %cst_65 : f32 to vector<8x32xf32>
    %136 = arith.maximumf %134, %135 : vector<8x32xf32>
    %cst_66 = arith.constant dense<0.000000e+00> : vector<8x64xf32>
    %137 = tpu.matmul %136, %131, %cst_66 {dimension_numbers = #tpu.dot_dimension_numbers<[1], [0], [0], [1], [0, 0, 1, 1], [], []>} : vector<8x32xf32>, vector<32x64xf32>, vector<8x64xf32> -> vector<8x64xf32>
    %138 = vector.broadcast %107 : vector<1x64xf32> to vector<8x64xf32>
    %139 = arith.addf %137, %138 : vector<8x64xf32>
    %140 = arith.addf %129, %139 : vector<8x64xf32>
    %cst_67 = arith.constant dense<0.000000e+00> : vector<8xf32>
    %141 = vector.multi_reduction <add>, %140, %cst_67 [1] : vector<8x64xf32> to vector<8xf32>
    %142 = vector.shape_cast %141 : vector<8xf32> to vector<8x1xf32>
    %cst_68 = arith.constant 6.400000e+01 : f32
    %143 = vector.broadcast %cst_68 : f32 to vector<8x1xf32>
    %144 = arith.divf %142, %143 : vector<8x1xf32>
    %145 = vector.broadcast %144 : vector<8x1xf32> to vector<8x64xf32>
    %146 = arith.subf %140, %145 : vector<8x64xf32>
    %147 = arith.mulf %146, %146 : vector<8x64xf32>
    %cst_69 = arith.constant dense<0.000000e+00> : vector<8xf32>
    %148 = vector.multi_reduction <add>, %147, %cst_69 [1] : vector<8x64xf32> to vector<8xf32>
    %149 = vector.shape_cast %148 : vector<8xf32> to vector<8x1xf32>
    %cst_70 = arith.constant 0.0158730168 : f32
    %150 = vector.broadcast %cst_70 : f32 to vector<8x1xf32>
    %151 = arith.mulf %149, %150 : vector<8x1xf32>
    %152 = math.sqrt %151 : vector<8x1xf32>
    %cst_71 = arith.constant 9.99999997E-7 : f32
    %153 = vector.broadcast %cst_71 : f32 to vector<8x1xf32>
    %154 = arith.addf %152, %153 : vector<8x1xf32>
    %155 = vector.broadcast %154 : vector<8x1xf32> to vector<8x64xf32>
    %156 = arith.divf %146, %155 : vector<8x64xf32>
    %157 = vector.broadcast %105 : vector<1x64xf32> to vector<8x64xf32>
    %158 = arith.mulf %157, %156 : vector<8x64xf32>
    %159 = vector.broadcast %106 : vector<1x64xf32> to vector<8x64xf32>
    %160 = arith.addf %158, %159 : vector<8x64xf32>
    %c0_72 = arith.constant 0 : index
    %c0_73 = arith.constant 0 : index
    %161 = vector.load %arg7[%c0_72, %c0_73] : memref<8x64xf32, #tpu.memory_space<vmem>>, vector<8x64xf32>
    tpu.vector_store %arg7[%c0_72, %c0_73], %160 {strides = array<i32>} : memref<8x64xf32, #tpu.memory_space<vmem>>, vector<8x64xf32>,
    return
  }
  func.func @transform_0(%arg0: i32) -> (i32, i32) {
    %c0_i32 = arith.constant 0 : i32
    %c0_i32_0 = arith.constant 0 : i32
    return %arg0, %c0_i32 : i32, i32
  }
  func.func @transform_1(%arg0: i32) -> (i32, i32, i32) {
    %c0_i32 = arith.constant 0 : i32
    %c0_i32_0 = arith.constant 0 : i32
    %c0_i32_1 = arith.constant 0 : i32
    return %arg0, %c0_i32, %c0_i32_0 : i32, i32, i32
  }
  func.func @transform_2(%arg0: i32) -> (i32, i32, i32) {
    %c0_i32 = arith.constant 0 : i32
    %c0_i32_0 = arith.constant 0 : i32
    %c0_i32_1 = arith.constant 0 : i32
    return %arg0, %c0_i32, %c0_i32_0 : i32, i32, i32
  }
  func.func @transform_3(%arg0: i32) -> (i32, i32) {
    %c0_i32 = arith.constant 0 : i32
    %c0_i32_0 = arith.constant 0 : i32
    %c0_i32_1 = arith.constant 0 : i32
    return %c0_i32, %c0_i32_0 : i32, i32
  }
  func.func @transform_4(%arg0: i32) -> (i32, i32) {
    %c0_i32 = arith.constant 0 : i32
    %c0_i32_0 = arith.constant 0 : i32
    %c0_i32_1 = arith.constant 0 : i32
    return %c0_i32, %c0_i32_0 : i32, i32
  }
  func.func @transform_5(%arg0: i32) -> (i32, i32) {
    %c0_i32 = arith.constant 0 : i32
    %c0_i32_0 = arith.constant 0 : i32
    %c0_i32_1 = arith.constant 0 : i32
    return %c0_i32, %c0_i32_0 : i32, i32
  }
  func.func @transform_6(%arg0: i32) -> (i32, i32) {
    %c0_i32 = arith.constant 0 : i32
    %c0_i32_0 = arith.constant 0 : i32
    return %arg0, %c0_i32 : i32, i32
  }
}

</mosaic_0001>

<llo_original>
// kernel: tpu_custom_call.1
$region0: #{tpu_custom_call.1}
  #allocation0 [shape = 'u32[]', space=smem, size = 0x4, offset = 0x4, fixed_abs, tag = 'smem constant byte address 0x4 - core index']
  #allocation1 [shape = 'u32[144,128]{1,0:T(1,128)}', space=vmem, size = 0x12000, scoped, tag = 'internal scratch']
  %s0 = inlined_call_operand.vmem [shape: f32[16,64], index: 0, kind: input, shape index: {}]
  %s1 = inlined_call_operand.hbm [shape: f32[16,8,64], index: 1, kind: input, shape index: {}]
  %s2 = inlined_call_operand.hbm [shape: f32[16,8,64], index: 2, kind: input, shape index: {}]
  %s3 = inlined_call_operand.vmem [shape: f32[64,32], index: 3, kind: input, shape index: {}]
  %s4 = inlined_call_operand.vmem [shape: f32[32,64], index: 4, kind: input, shape index: {}]
  %s5 = inlined_call_operand.vmem [shape: f32[8,64], index: 5, kind: input, shape index: {}]
  %s6 = inlined_call_operand.hbm [shape: f32[16,64], index: 6, kind: output, shape index: {}]
  %s7 = sld [smem:[#allocation0]]
  $region65: #{tpu_custom_call.1} parent=0
    _
  %s9 = ssub.s32 1, %s7
  %s10 = scalar_select 0, %s9, %s7
  $region1: #{tpu_custom_call.1} parent=0
    #allocation2 [shape = 'u8[65536]{0}', space=vmem, size = 0x10000, scoped, tag = 'input window, operand 1']
    #allocation3 [shape = 's32[2]{0}', space=sflag, size = 0x8, scoped, tag = 'scoped memory for tpu_custom_call.1']
    #allocation4 [shape = 's32[2]{0}', space=sflag, size = 0x8, scoped, tag = 'scoped memory for tpu_custom_call.1']
    #allocation5 [shape = 'u8[65536]{0}', space=vmem, size = 0x10000, scoped, tag = 'input window, operand 2']
    #allocation6 [shape = 's32[2]{0}', space=sflag, size = 0x8, scoped, tag = 'scoped memory for tpu_custom_call.1']
    #allocation7 [shape = 'u8[8192]{0}', space=vmem, size = 0x2000, scoped, tag = 'output window, operand 0']
    %11 = vsyncpa [#allocation3], 0
    %s12 = scalar_lea.sflag [#allocation3], 1
    %13 = vsyncpa %s12, 0
    %14 = vsyncpa [#allocation6], 0
    %s15 = scalar_lea.sflag [#allocation6], 1
    %16 = vsyncpa %s15, 0
    %17 = vsyncpa [#allocation4], 0
    %s18 = scalar_lea.sflag [#allocation4], 1
    %19 = vsyncpa %s18, 0
    loop: start=0, step=1, limit=4
    $region2: #{tpu_custom_call.1} parent=1 // loop_pre_header
      _
    $region3: #{tpu_custom_call.1} parent=1 // loop_header
      %s21 = sphi 0, %s25
      %p22 = scmp.ge.s32.totalorder %s21, 4
      %s31 = sphi 0, %s33
      %s34 = sphi 0, %s31
      %s35 = sphi 0, %s34
      %s51 = sphi 0, %s35
      %s57 = sphi 0, %s59
      %s60 = sphi 0, %s57
      %s61 = sphi 0, %s60
      %s77 = sphi 0, %s61
      %s83 = sphi 0, %s85
      %s86 = sphi 0, %s83
      %s87 = sphi 0, %s86
      %s103 = sphi 0, %s87
      %s107 = sphi 0, %s107
      %s109 = sphi 0, %s107
      %s110 = sphi 0, %s109
      %s124 = sphi 0, %s110
      %s128 = sphi 0, %s128
      %s130 = sphi 0, %s128
      %s131 = sphi 0, %s130
      %s145 = sphi 0, %s131
      %s149 = sphi 0, %s149
      %s151 = sphi 0, %s149
      %s152 = sphi 0, %s151
      %s166 = sphi 0, %s152
      %s172 = sphi 0, %s174
      %s175 = sphi 0, %s172
      %s176 = sphi 0, %s175
      %s192 = sphi 0, %s176
    $region4: #{tpu_custom_call.1} parent=1 // loop_header_branch
      %24 = sbr.rel (%p22) target = $region8
    $region5: #{tpu_custom_call.1} parent=1 // loop_body
      %s26 = ssub.s32 %s21, 1
      %s27 = ssub.s32 %s21, 2
      %s28 = sadd.s32 %s21, 1
      %s29 = ssub.s32 %s21, %s28
      %p30 = scmp.eq.s32.totalorder %s29, 0
      %s32 = sadd.s32 %s31, 1
      %s33 = scalar_select %p30, %s31, %s32
      %p36 = pneg %p30
      %p37 = scmp.eq.s32.totalorder %s21, 1
      %p38 = por %p36, %p37
      %p39 = scmp.ne.s32.totalorder %s31, %s34
      %p40 = scmp.eq.s32.totalorder %s21, 0
      %p41 = por %p39, %p40
      %p42 = scmp.ne.s32.totalorder %s31, %s34
      %p43 = scmp.eq.s32.totalorder %s26, 1
      %p44 = por %p42, %p43
      %p45 = scmp.ne.s32.totalorder %s34, %s35
      %p46 = scmp.eq.s32.totalorder %s26, 0
      %p47 = por %p45, %p46
      %p48 = scmp.ne.s32.totalorder %s34, %s35
      %p49 = scmp.eq.s32.totalorder %s27, 1
      %p50 = por %p48, %p49
      %p52 = scmp.ne.s32.totalorder %s35, %s51
      %p53 = scmp.eq.s32.totalorder %s27, 0
      %p54 = por %p52, %p53
      %s55 = ssub.s32 %s21, %s28
      %p56 = scmp.eq.s32.totalorder %s55, 0
      %s58 = sadd.s32 %s57, 1
      %s59 = scalar_select %p56, %s57, %s58
      %p62 = pneg %p56
      %p63 = scmp.eq.s32.totalorder %s21, 1
      %p64 = por %p62, %p63
      %p65 = scmp.ne.s32.totalorder %s57, %s60
      %p66 = scmp.eq.s32.totalorder %s21, 0
      %p67 = por %p65, %p66
      %p68 = scmp.ne.s32.totalorder %s57, %s60
      %p69 = scmp.eq.s32.totalorder %s26, 1
      %p70 = por %p68, %p69
      %p71 = scmp.ne.s32.totalorder %s60, %s61
      %p72 = scmp.eq.s32.totalorder %s26, 0
      %p73 = por %p71, %p72
      %p74 = scmp.ne.s32.totalorder %s60, %s61
      %p75 = scmp.eq.s32.totalorder %s27, 1
      %p76 = por %p74, %p75
      %p78 = scmp.ne.s32.totalorder %s61, %s77
      %p79 = scmp.eq.s32.totalorder %s27, 0
      %p80 = por %p78, %p79
      %s81 = ssub.s32 %s21, %s28
      %p82 = scmp.eq.s32.totalorder %s81, 0
      %s84 = sadd.s32 %s83, 1
      %s85 = scalar_select %p82, %s83, %s84
      %p88 = pneg %p82
      %p89 = scmp.eq.s32.totalorder %s21, 1
      %p90 = por %p88, %p89
      %p91 = scmp.ne.s32.totalorder %s83, %s86
      %p92 = scmp.eq.s32.totalorder %s21, 0
      %p93 = por %p91, %p92
      %p94 = scmp.ne.s32.totalorder %s83, %s86
      %p95 = scmp.eq.s32.totalorder %s26, 1
      %p96 = por %p94, %p95
      %p97 = scmp.ne.s32.totalorder %s86, %s87
      %p98 = scmp.eq.s32.totalorder %s26, 0
      %p99 = por %p97, %p98
      %p100 = scmp.ne.s32.totalorder %s86, %s87
      %p101 = scmp.eq.s32.totalorder %s27, 1
      %p102 = por %p100, %p101
      %p104 = scmp.ne.s32.totalorder %s87, %s103
      %p105 = scmp.eq.s32.totalorder %s27, 0
      %p106 = por %p104, %p105
      %s108 = sadd.s32 %s107, 1
      %p111 = scmp.eq.s32.totalorder %s21, 1
      %p112 = scmp.ne.s32.totalorder %s107, %s109
      %p113 = scmp.eq.s32.totalorder %s21, 0
      %p114 = por %p112, %p113
      %p115 = scmp.ne.s32.totalorder %s107, %s109
      %p116 = scmp.eq.s32.totalorder %s26, 1
      %p117 = por %p115, %p116
      %p118 = scmp.ne.s32.totalorder %s109, %s110
      %p119 = scmp.eq.s32.totalorder %s26, 0
      %p120 = por %p118, %p119
      %p121 = scmp.ne.s32.totalorder %s109, %s110
      %p122 = scmp.eq.s32.totalorder %s27, 1
      %p123 = por %p121, %p122
      %p125 = scmp.ne.s32.totalorder %s110, %s124
      %p126 = scmp.eq.s32.totalorder %s27, 0
      %p127 = por %p125, %p126
      %s129 = sadd.s32 %s128, 1
      %p132 = scmp.eq.s32.totalorder %s21, 1
      %p133 = scmp.ne.s32.totalorder %s128, %s130
      %p134 = scmp.eq.s32.totalorder %s21, 0
      %p135 = por %p133, %p134
      %p136 = scmp.ne.s32.totalorder %s128, %s130
      %p137 = scmp.eq.s32.totalorder %s26, 1
      %p138 = por %p136, %p137
      %p139 = scmp.ne.s32.totalorder %s130, %s131
      %p140 = scmp.eq.s32.totalorder %s26, 0
      %p141 = por %p139, %p140
      %p142 = scmp.ne.s32.totalorder %s130, %s131
      %p143 = scmp.eq.s32.totalorder %s27, 1
      %p144 = por %p142, %p143
      %p146 = scmp.ne.s32.totalorder %s131, %s145
      %p147 = scmp.eq.s32.totalorder %s27, 0
      %p148 = por %p146, %p147
      %s150 = sadd.s32 %s149, 1
      %p153 = scmp.eq.s32.totalorder %s21, 1
      %p154 = scmp.ne.s32.totalorder %s149, %s151
      %p155 = scmp.eq.s32.totalorder %s21, 0
      %p156 = por %p154, %p155
      %p157 = scmp.ne.s32.totalorder %s149, %s151
      %p158 = scmp.eq.s32.totalorder %s26, 1
      %p159 = por %p157, %p158
      %p160 = scmp.ne.s32.totalorder %s151, %s152
      %p161 = scmp.eq.s32.totalorder %s26, 0
      %p162 = por %p160, %p161
      %p163 = scmp.ne.s32.totalorder %s151, %s152
      %p164 = scmp.eq.s32.totalorder %s27, 1
      %p165 = por %p163, %p164
      %p167 = scmp.ne.s32.totalorder %s152, %s166
      %p168 = scmp.eq.s32.totalorder %s27, 0
      %p169 = por %p167, %p168
      %s170 = ssub.s32 %s21, %s28
      %p171 = scmp.eq.s32.totalorder %s170, 0
      %s173 = sadd.s32 %s172, 1
      %s174 = scalar_select %p171, %s172, %s173
      %p177 = pneg %p171
      %p178 = scmp.eq.s32.totalorder %s21, 1
      %p179 = por %p177, %p178
      %p180 = scmp.ne.s32.totalorder %s172, %s175
      %p181 = scmp.eq.s32.totalorder %s21, 0
      %p182 = por %p180, %p181
      %p183 = scmp.ne.s32.totalorder %s172, %s175
      %p184 = scmp.eq.s32.totalorder %s26, 1
      %p185 = por %p183, %p184
      %p186 = scmp.ne.s32.totalorder %s175, %s176
      %p187 = scmp.eq.s32.totalorder %s26, 0
      %p188 = por %p186, %p187
      %p189 = scmp.ne.s32.totalorder %s175, %s176
      %p190 = scmp.eq.s32.totalorder %s27, 1
      %p191 = por %p189, %p190
      %p193 = scmp.ne.s32.totalorder %s176, %s192
      %p194 = scmp.eq.s32.totalorder %s27, 0
      %p195 = por %p193, %p194
      %p196 = scmp.le.s32.totalorder 1, %s21
      %p197 = scmp.lt.s32.totalorder %s21, 3
      %p198 = pnand %p196, %p197
      %p199 = pneg %p198
      // Predicated region
      $region9: #{tpu_custom_call.1} parent=5 // pred_check
        _
      $region10: #{tpu_custom_call.1} parent=5 // pred_check_branch
        %201 = sbr.rel (%p198) target = $region12
      $region11: #{tpu_custom_call.1} parent=5 // pred_region
        %s202 = ssub.s32 %s21, 1
        // Predicated region
        $region13: #{tpu_custom_call.1} parent=11 // pred_check
          %p203 = pneg %p120
        $region14: #{tpu_custom_call.1} parent=11 // pred_check_branch
          %205 = sbr.rel (%p203) target = $region16
        $region15: #{tpu_custom_call.1} parent=11 // pred_region
          _
        $region16: #{tpu_custom_call.1} parent=11 // pred_fallthru
          _
        // Predicated region
        $region17: #{tpu_custom_call.1} parent=11 // pred_check
          %p206 = pneg %p141
        $region18: #{tpu_custom_call.1} parent=11 // pred_check_branch
          %208 = sbr.rel (%p206) target = $region20
        $region19: #{tpu_custom_call.1} parent=11 // pred_region
          _
        $region20: #{tpu_custom_call.1} parent=11 // pred_fallthru
          _
        // Predicated region
        $region21: #{tpu_custom_call.1} parent=11 // pred_check
          %p209 = pneg %p162
        $region22: #{tpu_custom_call.1} parent=11 // pred_check_branch
          %211 = sbr.rel (%p209) target = $region24
        $region23: #{tpu_custom_call.1} parent=11 // pred_region
          _
        $region24: #{tpu_custom_call.1} parent=11 // pred_fallthru
          _
      $region12: #{tpu_custom_call.1} parent=5 // pred_fallthru
        _
      %p212 = scmp.lt.s32.totalorder %s21, 2
      // Predicated region
      $region25: #{tpu_custom_call.1} parent=5 // pred_check
        %p213 = pneg %p212
      $region26: #{tpu_custom_call.1} parent=5 // pred_check_branch
        %215 = sbr.rel (%p213) target = $region28
      $region27: #{tpu_custom_call.1} parent=5 // pred_region
        // Predicated region
        $region29: #{tpu_custom_call.1} parent=27 // pred_check
          %p216 = pneg %p41
        $region30: #{tpu_custom_call.1} parent=27 // pred_check_branch
          %218 = sbr.rel (%p216) target = $region32
        $region31: #{tpu_custom_call.1} parent=27 // pred_region
          %p219 = scmp.lt.s32.totalorder %s21, 1
          %s220 = scalar_select %p219, %s21, 1
          %s221 = smul.addr %s220, 8
          %s222 = scalar_lea.vmem %s0, %s221
        $region32: #{tpu_custom_call.1} parent=27 // pred_fallthru
          _
        // Predicated region
        $region33: #{tpu_custom_call.1} parent=27 // pred_check
          %p223 = pneg %p67
        $region34: #{tpu_custom_call.1} parent=27 // pred_check_branch
          %225 = sbr.rel (%p223) target = $region36
        $region35: #{tpu_custom_call.1} parent=27 // pred_region
          %s226 = sand.u32 %s57, 1
          %s227 = scalar_lea.sflag [#allocation3], %s226
          %s228 = sand.u32 %s57, 1
          %s229 = smul.addr %s228, 64
          %s230 = scalar_lea.vmem [#allocation2], %s229
          %s231 = smul.u32 8, %s21
          %s233 = ssub.s32 1024, 1024
          %234 = vsyncadd %s227, %s233
          %s235 = smul.addr %s231, 128
          %s236 = scalar_lea.hbm %s1, %s235
          %s237 = sshll.u32 %s230, 4
          %s238 = int_to_ptr.vmem [resolvable:$true] %s237
          %243 = dma.hbm_to_vmem [thread:$0]  %s236, 1024, %s238, %s227, 128, 128, 8
        $region36: #{tpu_custom_call.1} parent=27 // pred_fallthru
          _
        // Predicated region
        $region37: #{tpu_custom_call.1} parent=27 // pred_check
          %p244 = pneg %p93
        $region38: #{tpu_custom_call.1} parent=27 // pred_check_branch
          %246 = sbr.rel (%p244) target = $region40
        $region39: #{tpu_custom_call.1} parent=27 // pred_region
          %s247 = sand.u32 %s83, 1
          %s248 = scalar_lea.sflag [#allocation6], %s247
          %s249 = sand.u32 %s83, 1
          %s250 = smul.addr %s249, 64
          %s251 = scalar_lea.vmem [#allocation5], %s250
          %s252 = smul.u32 8, %s21
          %s254 = ssub.s32 1024, 1024
          %255 = vsyncadd %s248, %s254
          %s256 = smul.addr %s252, 128
          %s257 = scalar_lea.hbm %s2, %s256
          %s258 = sshll.u32 %s251, 4
          %s259 = int_to_ptr.vmem [resolvable:$true] %s258
          %264 = dma.hbm_to_vmem [thread:$0]  %s257, 1024, %s259, %s248, 128, 128, 8
        $region40: #{tpu_custom_call.1} parent=27 // pred_fallthru
          _
      $region28: #{tpu_custom_call.1} parent=5 // pred_fallthru
        _
      %p265 = scmp.le.s32.totalorder 1, %s21
      %p266 = scmp.lt.s32.totalorder %s21, 3
      %p267 = pnand %p265, %p266
      %p268 = pneg %p267
      // Predicated region
      $region41: #{tpu_custom_call.1} parent=5 // pred_check
        _
      $region42: #{tpu_custom_call.1} parent=5 // pred_check_branch
        %270 = sbr.rel (%p267) target = $region44
      $region43: #{tpu_custom_call.1} parent=5 // pred_region
        %s271 = ssub.s32 %s21, 1
        %s272 = sand.u32 %s60, 1
        %s273 = scalar_lea.sflag [#allocation3], %s272
        %s274 = sand.u32 %s60, 1
        %s275 = smul.addr %s274, 64
        %s276 = scalar_lea.vmem [#allocation2], %s275
        // Predicated region
        $region45: #{tpu_custom_call.1} parent=43 // pred_check
          %p277 = pneg %p73
        $region46: #{tpu_custom_call.1} parent=43 // pred_check_branch
          %279 = sbr.rel (%p277) target = $region48
        $region47: #{tpu_custom_call.1} parent=43 // pred_region
          %280 = dma.done %s273, 1024
        $region48: #{tpu_custom_call.1} parent=43 // pred_fallthru
          _
        %s281 = sand.u32 %s86, 1
        %s282 = scalar_lea.sflag [#allocation6], %s281
        %s283 = sand.u32 %s86, 1
        %s284 = smul.addr %s283, 64
        %s285 = scalar_lea.vmem [#allocation5], %s284
        // Predicated region
        $region49: #{tpu_custom_call.1} parent=43 // pred_check
          %p286 = pneg %p99
        $region50: #{tpu_custom_call.1} parent=43 // pred_check_branch
          %288 = sbr.rel (%p286) target = $region52
        $region51: #{tpu_custom_call.1} parent=43 // pred_region
          %289 = dma.done %s282, 1024
        $region52: #{tpu_custom_call.1} parent=43 // pred_fallthru
          _
        %p290 = scmp.lt.s32.totalorder %s26, 1
        %s291 = scalar_select %p290, %s26, 1
        %s292 = smul.addr %s291, 8
        %s293 = scalar_lea.vmem %s0, %s292
        %p294 = pneg %p47
        %p295 = pneg %p44
        %s296 = sand.u32 %s60, 1
        %s297 = scalar_lea.sflag [#allocation3], %s296
        %s298 = sand.u32 %s60, 1
        %s299 = smul.addr %s298, 64
        %s300 = scalar_lea.vmem [#allocation2], %s299
        %p301 = pneg %p73
        %p302 = pneg %p70
        %s303 = sand.u32 %s86, 1
        %s304 = scalar_lea.sflag [#allocation6], %s303
        %s305 = sand.u32 %s86, 1
        %s306 = smul.addr %s305, 64
        %s307 = scalar_lea.vmem [#allocation5], %s306
        %p308 = pneg %p99
        %p309 = pneg %p96
        %p310 = pneg %p120
        %p311 = pneg %p117
        %p312 = pneg %p141
        %p313 = pneg %p138
        %p314 = pneg %p162
        %p315 = pneg %p159
        %p316 = pneg %p188
        %p317 = pneg %p185
        %s318 = sand.u32 %s175, 1
        %s319 = scalar_lea.sflag [#allocation4], %s318
        %s320 = sand.u32 %s175, 1
        %s321 = smul.addr %s320, 8
        %s322 = scalar_lea.vmem [#allocation7], %s321
        %p323 = scmp.lt.s32.totalorder %s26, 1
        %s324 = scalar_select %p323, %s26, 1
        %s325 = smul.addr %s324, 8
        %s326 = scalar_lea.vmem %s0, %s325
        %s327 = smul.u32 8, %s26
        %s328 = smul.u32 8, %s26
        %v329 = vld [vmem:[%s326] sm:$0xff]
        %v330 = vld [vmem:[%s276] sm:$0x1]
        %v331 = vld [vmem:[%s276 + $0x8] sm:$0x1]
        %v332 = vld [vmem:[%s276 + $0x10] sm:$0x1]
        %v333 = vld [vmem:[%s276 + $0x18] sm:$0x1]
        %v334 = vld [vmem:[%s276 + $0x20] sm:$0x1]
        %v335 = vld [vmem:[%s276 + $0x28] sm:$0x1]
        %v336 = vld [vmem:[%s276 + $0x30] sm:$0x1]
        %v337 = vld [vmem:[%s276 + $0x38] sm:$0x1]
        %v346 = vrot.slane %v331, 7
        %vm347 = vcmask 1041409
        %v348 = vsel %vm347, %v346, %v330
        %v349 = vrot.slane %v332, 6
        %vm350 = vcmask 1042434
        %v351 = vsel %vm350, %v349, %v348
        %v352 = vrot.slane %v333, 5
        %vm353 = vcmask 1043459
        %v354 = vsel %vm353, %v352, %v351
        %v355 = vrot.slane %v334, 4
        %vm356 = vcmask 1044484
        %v357 = vsel %vm356, %v355, %v354
        %v358 = vrot.slane %v335, 3
        %vm359 = vcmask 1045509
        %v360 = vsel %vm359, %v358, %v357
        %v361 = vrot.slane %v336, 2
        %vm362 = vcmask 1046534
        %v363 = vsel %vm362, %v361, %v360
        %v364 = vrot.slane %v337, 1
        %vm365 = vcmask 1047559
        %v366 = vsel %vm365, %v364, %v363
        %v368 = vmul.f32 %v329, %v366
        %vm369 = vcmask 523264
        %v370 = vsel %vm369, %v368, 0.0
        %371 = vadd.xlane.f32.xlu0 %v370
        %v372 = vpop.xlane.xlu0 %371
        %v373 = vld [vmem:[%s276 + $0x1] sm:$0x1]
        %v374 = vld [vmem:[%s276 + $0x9] sm:$0x1]
        %v375 = vld [vmem:[%s276 + $0x11] sm:$0x1]
        %v376 = vld [vmem:[%s276 + $0x19] sm:$0x1]
        %v377 = vld [vmem:[%s276 + $0x21] sm:$0x1]
        %v378 = vld [vmem:[%s276 + $0x29] sm:$0x1]
        %v379 = vld [vmem:[%s276 + $0x31] sm:$0x1]
        %v380 = vld [vmem:[%s276 + $0x39] sm:$0x1]
        %v389 = vrot.slane %v374, 7
        %v390 = vsel %vm347, %v389, %v373
        %v391 = vrot.slane %v375, 6
        %v392 = vsel %vm350, %v391, %v390
        %v393 = vrot.slane %v376, 5
        %v394 = vsel %vm353, %v393, %v392
        %v395 = vrot.slane %v377, 4
        %v396 = vsel %vm356, %v395, %v394
        %v397 = vrot.slane %v378, 3
        %v398 = vsel %vm359, %v397, %v396
        %v399 = vrot.slane %v379, 2
        %v400 = vsel %vm362, %v399, %v398
        %v401 = vrot.slane %v380, 1
        %v402 = vsel %vm365, %v401, %v400
        %v404 = vmul.f32 %v329, %v402
        %v405 = vsel %vm369, %v404, 0.0
        %406 = vadd.xlane.f32.xlu0 %v405
        %v407 = vpop.xlane.xlu0 %406
        %v408 = vld [vmem:[%s276 + $0x2] sm:$0x1]
        %v409 = vld [vmem:[%s276 + $0xa] sm:$0x1]
        %v410 = vld [vmem:[%s276 + $0x12] sm:$0x1]
        %v411 = vld [vmem:[%s276 + $0x1a] sm:$0x1]
        %v412 = vld [vmem:[%s276 + $0x22] sm:$0x1]
        %v413 = vld [vmem:[%s276 + $0x2a] sm:$0x1]
        %v414 = vld [vmem:[%s276 + $0x32] sm:$0x1]
        %v415 = vld [vmem:[%s276 + $0x3a] sm:$0x1]
        %v424 = vrot.slane %v409, 7
        %v425 = vsel %vm347, %v424, %v408
        %v426 = vrot.slane %v410, 6
        %v427 = vsel %vm350, %v426, %v425
        %v428 = vrot.slane %v411, 5
        %v429 = vsel %vm353, %v428, %v427
        %v430 = vrot.slane %v412, 4
        %v431 = vsel %vm356, %v430, %v429
        %v432 = vrot.slane %v413, 3
        %v433 = vsel %vm359, %v432, %v431
        %v434 = vrot.slane %v414, 2
        %v435 = vsel %vm362, %v434, %v433
        %v436 = vrot.slane %v415, 1
        %v437 = vsel %vm365, %v436, %v435
        %v439 = vmul.f32 %v329, %v437
        %v440 = vsel %vm369, %v439, 0.0
        %441 = vadd.xlane.f32.xlu0 %v440
        %v442 = vpop.xlane.xlu0 %441
        %v443 = vld [vmem:[%s276 + $0x3] sm:$0x1]
        %v444 = vld [vmem:[%s276 + $0xb] sm:$0x1]
        %v445 = vld [vmem:[%s276 + $0x13] sm:$0x1]
        %v446 = vld [vmem:[%s276 + $0x1b] sm:$0x1]
        %v447 = vld [vmem:[%s276 + $0x23] sm:$0x1]
        %v448 = vld [vmem:[%s276 + $0x2b] sm:$0x1]
        %v449 = vld [vmem:[%s276 + $0x33] sm:$0x1]
        %v450 = vld [vmem:[%s276 + $0x3b] sm:$0x1]
        %v459 = vrot.slane %v444, 7
        %v460 = vsel %vm347, %v459, %v443
        %v461 = vrot.slane %v445, 6
        %v462 = vsel %vm350, %v461, %v460
        %v463 = vrot.slane %v446, 5
        %v464 = vsel %vm353, %v463, %v462
        %v465 = vrot.slane %v447, 4
        %v466 = vsel %vm356, %v465, %v464
        %v467 = vrot.slane %v448, 3
        %v468 = vsel %vm359, %v467, %v466
        %v469 = vrot.slane %v449, 2
        %v470 = vsel %vm362, %v469, %v468
        %v471 = vrot.slane %v450, 1
        %v472 = vsel %vm365, %v471, %v470
        %v474 = vmul.f32 %v329, %v472
        %v475 = vsel %vm369, %v474, 0.0
        %476 = vadd.xlane.f32.xlu0 %v475
        %v477 = vpop.xlane.xlu0 %476
        %v478 = vld [vmem:[%s276 + $0x4] sm:$0x1]
        %v479 = vld [vmem:[%s276 + $0xc] sm:$0x1]
        %v480 = vld [vmem:[%s276 + $0x14] sm:$0x1]
        %v481 = vld [vmem:[%s276 + $0x1c] sm:$0x1]
        %v482 = vld [vmem:[%s276 + $0x24] sm:$0x1]
        %v483 = vld [vmem:[%s276 + $0x2c] sm:$0x1]
        %v484 = vld [vmem:[%s276 + $0x34] sm:$0x1]
        %v485 = vld [vmem:[%s276 + $0x3c] sm:$0x1]
        %v494 = vrot.slane %v479, 7
        %v495 = vsel %vm347, %v494, %v478
        %v496 = vrot.slane %v480, 6
        %v497 = vsel %vm350, %v496, %v495
        %v498 = vrot.slane %v481, 5
        %v499 = vsel %vm353, %v498, %v497
        %v500 = vrot.slane %v482, 4
        %v501 = vsel %vm356, %v500, %v499
        %v502 = vrot.slane %v483, 3
        %v503 = vsel %vm359, %v502, %v501
        %v504 = vrot.slane %v484, 2
        %v505 = vsel %vm362, %v504, %v503
        %v506 = vrot.slane %v485, 1
        %v507 = vsel %vm365, %v506, %v505
        %v509 = vmul.f32 %v329, %v507
        %v510 = vsel %vm369, %v509, 0.0
        %511 = vadd.xlane.f32.xlu0 %v510
        %v512 = vpop.xlane.xlu0 %511
        %v513 = vld [vmem:[%s276 + $0x5] sm:$0x1]
        %v514 = vld [vmem:[%s276 + $0xd] sm:$0x1]
        %v515 = vld [vmem:[%s276 + $0x15] sm:$0x1]
        %v516 = vld [vmem:[%s276 + $0x1d] sm:$0x1]
        %v517 = vld [vmem:[%s276 + $0x25] sm:$0x1]
        %v518 = vld [vmem:[%s276 + $0x2d] sm:$0x1]
        %v519 = vld [vmem:[%s276 + $0x35] sm:$0x1]
        %v520 = vld [vmem:[%s276 + $0x3d] sm:$0x1]
        %v529 = vrot.slane %v514, 7
        %v530 = vsel %vm347, %v529, %v513
        %v531 = vrot.slane %v515, 6
        %v532 = vsel %vm350, %v531, %v530
        %v533 = vrot.slane %v516, 5
        %v534 = vsel %vm353, %v533, %v532
        %v535 = vrot.slane %v517, 4
        %v536 = vsel %vm356, %v535, %v534
        %v537 = vrot.slane %v518, 3
        %v538 = vsel %vm359, %v537, %v536
        %v539 = vrot.slane %v519, 2
        %v540 = vsel %vm362, %v539, %v538
        %v541 = vrot.slane %v520, 1
        %v542 = vsel %vm365, %v541, %v540
        %v544 = vmul.f32 %v329, %v542
        %v545 = vsel %vm369, %v544, 0.0
        %546 = vadd.xlane.f32.xlu0 %v545
        %v547 = vpop.xlane.xlu0 %546
        %v548 = vld [vmem:[%s276 + $0x6] sm:$0x1]
        %v549 = vld [vmem:[%s276 + $0xe] sm:$0x1]
        %v550 = vld [vmem:[%s276 + $0x16] sm:$0x1]
        %v551 = vld [vmem:[%s276 + $0x1e] sm:$0x1]
        %v552 = vld [vmem:[%s276 + $0x26] sm:$0x1]
        %v553 = vld [vmem:[%s276 + $0x2e] sm:$0x1]
        %v554 = vld [vmem:[%s276 + $0x36] sm:$0x1]
        %v555 = vld [vmem:[%s276 + $0x3e] sm:$0x1]
        %v564 = vrot.slane %v549, 7
        %v565 = vsel %vm347, %v564, %v548
        %v566 = vrot.slane %v550, 6
        %v567 = vsel %vm350, %v566, %v565
        %v568 = vrot.slane %v551, 5
        %v569 = vsel %vm353, %v568, %v567
        %v570 = vrot.slane %v552, 4
        %v571 = vsel %vm356, %v570, %v569
        %v572 = vrot.slane %v553, 3
        %v573 = vsel %vm359, %v572, %v571
        %v574 = vrot.slane %v554, 2
        %v575 = vsel %vm362, %v574, %v573
        %v576 = vrot.slane %v555, 1
        %v577 = vsel %vm365, %v576, %v575
        %v579 = vmul.f32 %v329, %v577
        %v580 = vsel %vm369, %v579, 0.0
        %581 = vadd.xlane.f32.xlu0 %v580
        %v582 = vpop.xlane.xlu0 %581
        %v583 = vld [vmem:[%s276 + $0x7] sm:$0x1]
        %v584 = vld [vmem:[%s276 + $0xf] sm:$0x1]
        %v585 = vld [vmem:[%s276 + $0x17] sm:$0x1]
        %v586 = vld [vmem:[%s276 + $0x1f] sm:$0x1]
        %v587 = vld [vmem:[%s276 + $0x27] sm:$0x1]
        %v588 = vld [vmem:[%s276 + $0x2f] sm:$0x1]
        %v589 = vld [vmem:[%s276 + $0x37] sm:$0x1]
        %v590 = vld [vmem:[%s276 + $0x3f] sm:$0x1]
        %v599 = vrot.slane %v584, 7
        %v600 = vsel %vm347, %v599, %v583
        %v601 = vrot.slane %v585, 6
        %v602 = vsel %vm350, %v601, %v600
        %v603 = vrot.slane %v586, 5
        %v604 = vsel %vm353, %v603, %v602
        %v605 = vrot.slane %v587, 4
        %v606 = vsel %vm356, %v605, %v604
        %v607 = vrot.slane %v588, 3
        %v608 = vsel %vm359, %v607, %v606
        %v609 = vrot.slane %v589, 2
        %v610 = vsel %vm362, %v609, %v608
        %v611 = vrot.slane %v590, 1
        %v612 = vsel %vm365, %v611, %v610
        %v614 = vmul.f32 %v329, %v612
        %v615 = vsel %vm369, %v614, 0.0
        %616 = vadd.xlane.f32.xlu0 %v615
        %v617 = vpop.xlane.xlu0 %616
        %vm618 = vcmask 7168
        %v619 = vsel %vm618, %v372, %v407
        %vm620 = vcmask 15360
        %v621 = vsel %vm620, %v619, %v442
        %vm622 = vcmask 23552
        %v623 = vsel %vm622, %v621, %v477
        %vm624 = vcmask 31744
        %v625 = vsel %vm624, %v623, %v512
        %vm626 = vcmask 39936
        %v627 = vsel %vm626, %v625, %v547
        %vm628 = vcmask 48128
        %v629 = vsel %vm628, %v627, %v582
        %vm630 = vcmask 56320
        %v631 = vsel %vm630, %v629, %v617
        %v632 = vmul.f32 %v631, 0.125
        %vm633 = vcmask 64512
        %v634 = vsel %vm633, %v632, -inf
        %635 = vmax.xlane.f32.xlu0 %v634
        %v636 = vpop.xlane.xlu0 %635
        %v637 = vsub.f32 %v632, %v636
        %v638 = vmul.f32 %v637, 1.442695
        %v639 = vpow.pop %v638
        %v640 = vsel %vm633, %v639, 0.0
        %641 = vadd.xlane.f32.xlu0 %v640
        %v642 = vpop.xlane.xlu0 %641
        %v643 = vrcp.pop %v642
        %v644 = vmul.f32 %v639, %v643
        %v645 = vld [vmem:[%s285] sm:$0x1]
        %v646 = vld [vmem:[%s285 + $0x8] sm:$0x1]
        %v647 = vld [vmem:[%s285 + $0x10] sm:$0x1]
        %v648 = vld [vmem:[%s285 + $0x18] sm:$0x1]
        %v649 = vld [vmem:[%s285 + $0x20] sm:$0x1]
        %v650 = vld [vmem:[%s285 + $0x28] sm:$0x1]
        %v651 = vld [vmem:[%s285 + $0x30] sm:$0x1]
        %v652 = vld [vmem:[%s285 + $0x38] sm:$0x1]
        %654 = vset.pattern.permute.xlu0 0
        %655 = vperm.xlu0 %654, %v644
        %v656 = vpop.permute.xlu0 %655
        %v666 = vrot.slane %v646, 7
        %v667 = vsel %vm347, %v666, %v645
        %v668 = vrot.slane %v647, 6
        %v669 = vsel %vm350, %v668, %v667
        %v670 = vrot.slane %v648, 5
        %v671 = vsel %vm353, %v670, %v669
        %v672 = vrot.slane %v649, 4
        %v673 = vsel %vm356, %v672, %v671
        %v674 = vrot.slane %v650, 3
        %v675 = vsel %vm359, %v674, %v673
        %v676 = vrot.slane %v651, 2
        %v677 = vsel %vm362, %v676, %v675
        %v678 = vrot.slane %v652, 1
        %v679 = vsel %vm365, %v678, %v677
        %v681 = vmul.f32 %v656, %v679
        %v682 = vadd.f32 %v681, 0.0
        %v683 = vld [vmem:[%s285 + $0x1] sm:$0x1]
        %v684 = vld [vmem:[%s285 + $0x9] sm:$0x1]
        %v685 = vld [vmem:[%s285 + $0x11] sm:$0x1]
        %v686 = vld [vmem:[%s285 + $0x19] sm:$0x1]
        %v687 = vld [vmem:[%s285 + $0x21] sm:$0x1]
        %v688 = vld [vmem:[%s285 + $0x29] sm:$0x1]
        %v689 = vld [vmem:[%s285 + $0x31] sm:$0x1]
        %v690 = vld [vmem:[%s285 + $0x39] sm:$0x1]
        %691 = vset.pattern.permute.xlu0 1
        %692 = vperm.xlu0 %691, %v644
        %v693 = vpop.permute.xlu0 %692
        %v703 = vrot.slane %v684, 7
        %v704 = vsel %vm347, %v703, %v683
        %v705 = vrot.slane %v685, 6
        %v706 = vsel %vm350, %v705, %v704
        %v707 = vrot.slane %v686, 5
        %v708 = vsel %vm353, %v707, %v706
        %v709 = vrot.slane %v687, 4
        %v710 = vsel %vm356, %v709, %v708
        %v711 = vrot.slane %v688, 3
        %v712 = vsel %vm359, %v711, %v710
        %v713 = vrot.slane %v689, 2
        %v714 = vsel %vm362, %v713, %v712
        %v715 = vrot.slane %v690, 1
        %v716 = vsel %vm365, %v715, %v714
        %v718 = vmul.f32 %v693, %v716
        %v719 = vadd.f32 %v682, %v718
        %v720 = vld [vmem:[%s285 + $0x2] sm:$0x1]
        %v721 = vld [vmem:[%s285 + $0xa] sm:$0x1]
        %v722 = vld [vmem:[%s285 + $0x12] sm:$0x1]
        %v723 = vld [vmem:[%s285 + $0x1a] sm:$0x1]
        %v724 = vld [vmem:[%s285 + $0x22] sm:$0x1]
        %v725 = vld [vmem:[%s285 + $0x2a] sm:$0x1]
        %v726 = vld [vmem:[%s285 + $0x32] sm:$0x1]
        %v727 = vld [vmem:[%s285 + $0x3a] sm:$0x1]
        %728 = vset.pattern.permute.xlu0 2
        %729 = vperm.xlu0 %728, %v644
        %v730 = vpop.permute.xlu0 %729
        %v740 = vrot.slane %v721, 7
        %v741 = vsel %vm347, %v740, %v720
        %v742 = vrot.slane %v722, 6
        %v743 = vsel %vm350, %v742, %v741
        %v744 = vrot.slane %v723, 5
        %v745 = vsel %vm353, %v744, %v743
        %v746 = vrot.slane %v724, 4
        %v747 = vsel %vm356, %v746, %v745
        %v748 = vrot.slane %v725, 3
        %v749 = vsel %vm359, %v748, %v747
        %v750 = vrot.slane %v726, 2
        %v751 = vsel %vm362, %v750, %v749
        %v752 = vrot.slane %v727, 1
        %v753 = vsel %vm365, %v752, %v751
        %v755 = vmul.f32 %v730, %v753
        %v756 = vadd.f32 %v719, %v755
        %v757 = vld [vmem:[%s285 + $0x3] sm:$0x1]
        %v758 = vld [vmem:[%s285 + $0xb] sm:$0x1]
        %v759 = vld [vmem:[%s285 + $0x13] sm:$0x1]
        %v760 = vld [vmem:[%s285 + $0x1b] sm:$0x1]
        %v761 = vld [vmem:[%s285 + $0x23] sm:$0x1]
        %v762 = vld [vmem:[%s285 + $0x2b] sm:$0x1]
        %v763 = vld [vmem:[%s285 + $0x33] sm:$0x1]
        %v764 = vld [vmem:[%s285 + $0x3b] sm:$0x1]
        %765 = vset.pattern.permute.xlu0 3
        %766 = vperm.xlu0 %765, %v644
        %v767 = vpop.permute.xlu0 %766
        %v777 = vrot.slane %v758, 7
        %v778 = vsel %vm347, %v777, %v757
        %v779 = vrot.slane %v759, 6
        %v780 = vsel %vm350, %v779, %v778
        %v781 = vrot.slane %v760, 5
        %v782 = vsel %vm353, %v781, %v780
        %v783 = vrot.slane %v761, 4
        %v784 = vsel %vm356, %v783, %v782
        %v785 = vrot.slane %v762, 3
        %v786 = vsel %vm359, %v785, %v784
        %v787 = vrot.slane %v763, 2
        %v788 = vsel %vm362, %v787, %v786
        %v789 = vrot.slane %v764, 1
        %v790 = vsel %vm365, %v789, %v788
        %v792 = vmul.f32 %v767, %v790
        %v793 = vadd.f32 %v756, %v792
        %v794 = vld [vmem:[%s285 + $0x4] sm:$0x1]
        %v795 = vld [vmem:[%s285 + $0xc] sm:$0x1]
        %v796 = vld [vmem:[%s285 + $0x14] sm:$0x1]
        %v797 = vld [vmem:[%s285 + $0x1c] sm:$0x1]
        %v798 = vld [vmem:[%s285 + $0x24] sm:$0x1]
        %v799 = vld [vmem:[%s285 + $0x2c] sm:$0x1]
        %v800 = vld [vmem:[%s285 + $0x34] sm:$0x1]
        %v801 = vld [vmem:[%s285 + $0x3c] sm:$0x1]
        %802 = vset.pattern.permute.xlu0 4
        %803 = vperm.xlu0 %802, %v644
        %v804 = vpop.permute.xlu0 %803
        %v814 = vrot.slane %v795, 7
        %v815 = vsel %vm347, %v814, %v794
        %v816 = vrot.slane %v796, 6
        %v817 = vsel %vm350, %v816, %v815
        %v818 = vrot.slane %v797, 5
        %v819 = vsel %vm353, %v818, %v817
        %v820 = vrot.slane %v798, 4
        %v821 = vsel %vm356, %v820, %v819
        %v822 = vrot.slane %v799, 3
        %v823 = vsel %vm359, %v822, %v821
        %v824 = vrot.slane %v800, 2
        %v825 = vsel %vm362, %v824, %v823
        %v826 = vrot.slane %v801, 1
        %v827 = vsel %vm365, %v826, %v825
        %v829 = vmul.f32 %v804, %v827
        %v830 = vadd.f32 %v793, %v829
        %v831 = vld [vmem:[%s285 + $0x5] sm:$0x1]
        %v832 = vld [vmem:[%s285 + $0xd] sm:$0x1]
        %v833 = vld [vmem:[%s285 + $0x15] sm:$0x1]
        %v834 = vld [vmem:[%s285 + $0x1d] sm:$0x1]
        %v835 = vld [vmem:[%s285 + $0x25] sm:$0x1]
        %v836 = vld [vmem:[%s285 + $0x2d] sm:$0x1]
        %v837 = vld [vmem:[%s285 + $0x35] sm:$0x1]
        %v838 = vld [vmem:[%s285 + $0x3d] sm:$0x1]
        %839 = vset.pattern.permute.xlu0 5
        %840 = vperm.xlu0 %839, %v644
        %v841 = vpop.permute.xlu0 %840
        %v851 = vrot.slane %v832, 7
        %v852 = vsel %vm347, %v851, %v831
        %v853 = vrot.slane %v833, 6
        %v854 = vsel %vm350, %v853, %v852
        %v855 = vrot.slane %v834, 5
        %v856 = vsel %vm353, %v855, %v854
        %v857 = vrot.slane %v835, 4
        %v858 = vsel %vm356, %v857, %v856
        %v859 = vrot.slane %v836, 3
        %v860 = vsel %vm359, %v859, %v858
        %v861 = vrot.slane %v837, 2
        %v862 = vsel %vm362, %v861, %v860
        %v863 = vrot.slane %v838, 1
        %v864 = vsel %vm365, %v863, %v862
        %v866 = vmul.f32 %v841, %v864
        %v867 = vadd.f32 %v830, %v866
        %v868 = vld [vmem:[%s285 + $0x6] sm:$0x1]
        %v869 = vld [vmem:[%s285 + $0xe] sm:$0x1]
        %v870 = vld [vmem:[%s285 + $0x16] sm:$0x1]
        %v871 = vld [vmem:[%s285 + $0x1e] sm:$0x1]
        %v872 = vld [vmem:[%s285 + $0x26] sm:$0x1]
        %v873 = vld [vmem:[%s285 + $0x2e] sm:$0x1]
        %v874 = vld [vmem:[%s285 + $0x36] sm:$0x1]
        %v875 = vld [vmem:[%s285 + $0x3e] sm:$0x1]
        %876 = vset.pattern.permute.xlu0 6
        %877 = vperm.xlu0 %876, %v644
        %v878 = vpop.permute.xlu0 %877
        %v888 = vrot.slane %v869, 7
        %v889 = vsel %vm347, %v888, %v868
        %v890 = vrot.slane %v870, 6
        %v891 = vsel %vm350, %v890, %v889
        %v892 = vrot.slane %v871, 5
        %v893 = vsel %vm353, %v892, %v891
        %v894 = vrot.slane %v872, 4
        %v895 = vsel %vm356, %v894, %v893
        %v896 = vrot.slane %v873, 3
        %v897 = vsel %vm359, %v896, %v895
        %v898 = vrot.slane %v874, 2
        %v899 = vsel %vm362, %v898, %v897
        %v900 = vrot.slane %v875, 1
        %v901 = vsel %vm365, %v900, %v899
        %v903 = vmul.f32 %v878, %v901
        %v904 = vadd.f32 %v867, %v903
        %v905 = vld [vmem:[%s285 + $0x7] sm:$0x1]
        %v906 = vld [vmem:[%s285 + $0xf] sm:$0x1]
        %v907 = vld [vmem:[%s285 + $0x17] sm:$0x1]
        %v908 = vld [vmem:[%s285 + $0x1f] sm:$0x1]
        %v909 = vld [vmem:[%s285 + $0x27] sm:$0x1]
        %v910 = vld [vmem:[%s285 + $0x2f] sm:$0x1]
        %v911 = vld [vmem:[%s285 + $0x37] sm:$0x1]
        %v912 = vld [vmem:[%s285 + $0x3f] sm:$0x1]
        %913 = vset.pattern.permute.xlu0 7
        %914 = vperm.xlu0 %913, %v644
        %v915 = vpop.permute.xlu0 %914
        %v925 = vrot.slane %v906, 7
        %v926 = vsel %vm347, %v925, %v905
        %v927 = vrot.slane %v907, 6
        %v928 = vsel %vm350, %v927, %v926
        %v929 = vrot.slane %v908, 5
        %v930 = vsel %vm353, %v929, %v928
        %v931 = vrot.slane %v909, 4
        %v932 = vsel %vm356, %v931, %v930
        %v933 = vrot.slane %v910, 3
        %v934 = vsel %vm359, %v933, %v932
        %v935 = vrot.slane %v911, 2
        %v936 = vsel %vm362, %v935, %v934
        %v937 = vrot.slane %v912, 1
        %v938 = vsel %vm365, %v937, %v936
        %v940 = vmul.f32 %v915, %v938
        %v941 = vadd.f32 %v904, %v940
        %v942 = vld [vmem:[%s5] sm:$0xff]
        %v943 = vadd.f32 %v941, %v329
        %v944 = vsel %vm369, %v943, 0.0
        %945 = vadd.xlane.f32.xlu0 %v944
        %v946 = vpop.xlane.xlu0 %945
        %v947 = vrcp.pop 64.0
        %v948 = vmul.f32 %v946, %v947
        %v949 = vsub.f32 %v943, %v948
        %v950 = vmul.f32 %v949, %v949
        %v951 = vsel %vm369, %v950, 0.0
        %952 = vadd.xlane.f32.xlu0 %v951
        %v953 = vpop.xlane.xlu0 %952
        %v954 = vmul.f32 %v953, 0.015873017
        %v955 = vrsqrt.pop %v954
        %v956 = vmul.f32 %v954, %v955
        %vm957 = vcmp.eq.f32.partialorder %v954, inf
        %v958 = vsel %vm957, %v954, %v956
        %vm959 = vcmp.eq.f32.partialorder %v954, 0.0
        %v960 = vand.u32 %v954, 2147483648
        %v961 = vsel %vm959, %v960, %v958
        %v962 = vadd.f32 %v961, 1e-06
        %v963 = vrcp.pop %v962
        %v964 = vmul.f32 %v949, %v963
        %v965 = vlaneseq
        %v966 = vshrl.u32 %v965, 7
        %v967 = vsub.s32 0, %v966
        %v968 = vrot.slane %v942, %v967
        %v969 = vmul.f32 %v968, %v964
        %v970 = vlaneseq
        %v971 = vshrl.u32 %v970, 7
        %v972 = vsub.s32 1, %v971
        %v973 = vrot.slane %v942, %v972
        %v974 = vadd.f32 %v969, %v973
        %v975 = vld [vmem:[%s3] sm:$0xff]
        %v976 = vld [vmem:[%s3 + $0x8] sm:$0xff]
        %v977 = vld [vmem:[%s3 + $0x10] sm:$0xff]
        %v978 = vld [vmem:[%s3 + $0x18] sm:$0xff]
        %v979 = vld [vmem:[%s3 + $0x20] sm:$0xff]
        %v980 = vld [vmem:[%s3 + $0x28] sm:$0xff]
        %v981 = vld [vmem:[%s3 + $0x30] sm:$0xff]
        %v982 = vld [vmem:[%s3 + $0x38] sm:$0xff]
        %v983 = vld [vmem:[%s4] sm:$0xff]
        %v984 = vld [vmem:[%s4 + $0x8] sm:$0xff]
        %v985 = vld [vmem:[%s4 + $0x10] sm:$0xff]
        %v986 = vld [vmem:[%s4 + $0x18] sm:$0xff]
        %v987 = vlaneseq
        %v988 = vshrl.u32 %v987, 7
        %v989 = vsub.s32 5, %v988
        %v990 = vrot.slane %v942, %v989
        %v992 = vsel %vm369, %v974, 0
        %994 = vmatprep.subr.mxu0 0.0
        %995 = vmatpush1.msra.mxu0 %v975
        %996 = vmatprep.subr.mxu0 0.0
        %997 = vmatpush1.msra.mxu0 %v976
        %998 = vmatprep.subr.mxu0 0.0
        %999 = vmatpush1.msra.mxu0 %v977
        %1000 = vmatprep.subr.mxu0 0.0
        %1001 = vmatpush1.msra.mxu0 %v978
        %1002 = vmatprep.subr.mxu0 0.0
        %1003 = vmatpush1.msra.mxu0 %v979
        %1004 = vmatprep.subr.mxu0 0.0
        %1005 = vmatpush1.msra.mxu0 %v980
        %1006 = vmatprep.subr.mxu0 0.0
        %1007 = vmatpush1.msra.mxu0 %v981
        %1008 = vmatprep.subr.mxu0 0.0
        %1009 = vmatpush1.msra.mxu0 %v982
        %1010 = vmatprep.subr.mxu0 0.0
        %1011 = vmatpush1.msra.mxu0 0.0
        %1012 = vmatprep.subr.mxu0 0.0
        %1013 = vmatpush1.msra.mxu0 0.0
        %1014 = vmatprep.subr.mxu0 0.0
        %1015 = vmatpush1.msra.mxu0 0.0
        %1016 = vmatprep.subr.mxu0 0.0
        %1017 = vmatpush1.msra.mxu0 0.0
        %1018 = vmatprep.subr.mxu0 0.0
        %1019 = vmatpush1.msra.mxu0 0.0
        %1020 = vmatprep.subr.mxu0 0.0
        %1021 = vmatpush1.msra.mxu0 0.0
        %1022 = vmatprep.subr.mxu0 0.0
        %1023 = vmatpush1.msra.mxu0 0.0
        %1024 = vmatprep.subr.mxu0 0.0
        %1025 = vmatpush1.msra.mxu0 0.0
        %1026 = vmatprep.subr.mxu0 0.0
        %1027 = vmatpush1.msra.mxu0 0.0
        %1028 = vmatprep.subr.mxu0 0.0
        %1029 = vmatpush1.msra.mxu0 0.0
        %1030 = vmatprep.subr.mxu0 0.0
        %1031 = vmatpush1.msra.mxu0 0.0
        %1032 = vmatprep.subr.mxu0 0.0
        %1033 = vmatpush1.msra.mxu0 0.0
        %1034 = vmatprep.subr.mxu0 0.0
        %1035 = vmatpush1.msra.mxu0 0.0
        %1036 = vmatprep.subr.mxu0 0.0
        %1037 = vmatpush1.msra.mxu0 0.0
        %1038 = vmatprep.subr.mxu0 0.0
        %1039 = vmatpush1.msra.mxu0 0.0
        %1040 = vmatprep.subr.mxu0 0.0
        %1041 = vmatpush1.msra.mxu0 0.0
        %1042 = vmatprep.subr.mxu0 0.0
        %1043 = vmatpush1.msra.mxu0 0.0
        %1044 = vmatprep.subr.mxu0 0.0
        %1045 = vmatpush1.msra.mxu0 0.0
        %1046 = vmatprep.subr.mxu0 0.0
        %1047 = vmatpush1.msra.mxu0 0.0
        %1048 = vmatprep.subr.mxu0 0.0
        %1049 = vmatpush1.msra.mxu0 0.0
        %1050 = vmatprep.subr.mxu0 0.0
        %1051 = vmatpush1.msra.mxu0 0.0
        %1052 = vmatprep.subr.mxu0 0.0
        %1053 = vmatpush1.msra.mxu0 0.0
        %1054 = vmatprep.subr.mxu0 0.0
        %1055 = vmatpush1.msra.mxu0 0.0
        %1056 = vmatprep.subr.mxu0 0.0
        %1057 = vmatpush1.msra.mxu0 0.0
        %1058 = vmatprep.mubr.f32.mxu0 0.0
        %1059 = vmatmul.mubr.f32.gmra.mrb[0].mxu0 %v992
        %v1060 = vpop.f32.mrb[0].mxu0
        %v1061 = vadd.f32 %v990, %v1060
        %v1062 = vpop.f32.mrb[0].mxu0
        %1063 = vdwg.mxu0
        %v1064 = vmax.f32 %v1061, 0.0
        %v1065 = vlaneseq
        %v1066 = vshrl.u32 %v1065, 7
        %v1067 = vsub.s32 4, %v1066
        %v1068 = vrot.slane %v942, %v1067
        %vm1069 = vcmask 261120
        %v1071 = vsel %vm1069, %v1064, 0
        %1073 = vmatprep.subr.mxu0 0.0
        %1074 = vmatpush1.msra.mxu0 %v983
        %1075 = vmatprep.subr.mxu0 0.0
        %1076 = vmatpush1.msra.mxu0 %v984
        %1077 = vmatprep.subr.mxu0 0.0
        %1078 = vmatpush1.msra.mxu0 %v985
        %1079 = vmatprep.subr.mxu0 0.0
        %1080 = vmatpush1.msra.mxu0 %v986
        %1081 = vmatprep.subr.mxu0 0.0
        %1082 = vmatpush1.msra.mxu0 0.0
        %1083 = vmatprep.subr.mxu0 0.0
        %1084 = vmatpush1.msra.mxu0 0.0
        %1085 = vmatprep.subr.mxu0 0.0
        %1086 = vmatpush1.msra.mxu0 0.0
        %1087 = vmatprep.subr.mxu0 0.0
        %1088 = vmatpush1.msra.mxu0 0.0
        %1089 = vmatprep.subr.mxu0 0.0
        %1090 = vmatpush1.msra.mxu0 0.0
        %1091 = vmatprep.subr.mxu0 0.0
        %1092 = vmatpush1.msra.mxu0 0.0
        %1093 = vmatprep.subr.mxu0 0.0
        %1094 = vmatpush1.msra.mxu0 0.0
        %1095 = vmatprep.subr.mxu0 0.0
        %1096 = vmatpush1.msra.mxu0 0.0
        %1097 = vmatprep.subr.mxu0 0.0
        %1098 = vmatpush1.msra.mxu0 0.0
        %1099 = vmatprep.subr.mxu0 0.0
        %1100 = vmatpush1.msra.mxu0 0.0
        %1101 = vmatprep.subr.mxu0 0.0
        %1102 = vmatpush1.msra.mxu0 0.0
        %1103 = vmatprep.subr.mxu0 0.0
        %1104 = vmatpush1.msra.mxu0 0.0
        %1105 = vmatprep.subr.mxu0 0.0
        %1106 = vmatpush1.msra.mxu0 0.0
        %1107 = vmatprep.subr.mxu0 0.0
        %1108 = vmatpush1.msra.mxu0 0.0
        %1109 = vmatprep.subr.mxu0 0.0
        %1110 = vmatpush1.msra.mxu0 0.0
        %1111 = vmatprep.subr.mxu0 0.0
        %1112 = vmatpush1.msra.mxu0 0.0
        %1113 = vmatprep.subr.mxu0 0.0
        %1114 = vmatpush1.msra.mxu0 0.0
        %1115 = vmatprep.subr.mxu0 0.0
        %1116 = vmatpush1.msra.mxu0 0.0
        %1117 = vmatprep.subr.mxu0 0.0
        %1118 = vmatpush1.msra.mxu0 0.0
        %1119 = vmatprep.subr.mxu0 0.0
        %1120 = vmatpush1.msra.mxu0 0.0
        %1121 = vmatprep.subr.mxu0 0.0
        %1122 = vmatpush1.msra.mxu0 0.0
        %1123 = vmatprep.subr.mxu0 0.0
        %1124 = vmatpush1.msra.mxu0 0.0
        %1125 = vmatprep.subr.mxu0 0.0
        %1126 = vmatpush1.msra.mxu0 0.0
        %1127 = vmatprep.subr.mxu0 0.0
        %1128 = vmatpush1.msra.mxu0 0.0
        %1129 = vmatprep.subr.mxu0 0.0
        %1130 = vmatpush1.msra.mxu0 0.0
        %1131 = vmatprep.subr.mxu0 0.0
        %1132 = vmatpush1.msra.mxu0 0.0
        %1133 = vmatprep.subr.mxu0 0.0
        %1134 = vmatpush1.msra.mxu0 0.0
        %1135 = vmatprep.subr.mxu0 0.0
        %1136 = vmatpush1.msra.mxu0 0.0
        %1137 = vmatprep.mubr.f32.mxu0 0.0
        %1138 = vmatmul.mubr.f32.gmra.mrb[0].mxu0 %v1071
        %v1139 = vpop.f32.mrb[0].mxu0
        %v1140 = vadd.f32 %v1068, %v1139
        %v1141 = vpop.f32.mrb[0].mxu0
        %1142 = vdwg.mxu0
        %v1143 = vadd.f32 %v974, %v1140
        %v1144 = vsel %vm369, %v1143, 0.0
        %1145 = vadd.xlane.f32.xlu0 %v1144
        %v1146 = vpop.xlane.xlu0 %1145
        %v1147 = vmul.f32 %v1146, %v947
        %v1148 = vsub.f32 %v1143, %v1147
        %v1149 = vmul.f32 %v1148, %v1148
        %v1150 = vsel %vm369, %v1149, 0.0
        %1151 = vadd.xlane.f32.xlu0 %v1150
        %v1152 = vpop.xlane.xlu0 %1151
        %v1153 = vmul.f32 %v1152, 0.015873017
        %v1154 = vrsqrt.pop %v1153
        %v1155 = vmul.f32 %v1153, %v1154
        %vm1156 = vcmp.eq.f32.partialorder %v1153, inf
        %v1157 = vsel %vm1156, %v1153, %v1155
        %vm1158 = vcmp.eq.f32.partialorder %v1153, 0.0
        %v1159 = vand.u32 %v1153, 2147483648
        %v1160 = vsel %vm1158, %v1159, %v1157
        %v1161 = vadd.f32 %v1160, 1e-06
        %v1162 = vrcp.pop %v1161
        %v1163 = vmul.f32 %v1148, %v1162
        %v1164 = vlaneseq
        %v1165 = vshrl.u32 %v1164, 7
        %v1166 = vsub.s32 2, %v1165
        %v1167 = vrot.slane %v942, %v1166
        %v1168 = vmul.f32 %v1167, %v1163
        %v1169 = vlaneseq
        %v1170 = vshrl.u32 %v1169, 7
        %v1171 = vsub.s32 3, %v1170
        %v1172 = vrot.slane %v942, %v1171
        %v1173 = vadd.f32 %v1168, %v1172
        %1174 = vst.msk [vmem:[%s322] sm:$0xff] %vm369, %v1173
        %s1175 = sand.u32 %s175, 1
        %s1176 = scalar_lea.sflag [#allocation4], %s1175
        %s1177 = sand.u32 %s175, 1
        %s1178 = smul.addr %s1177, 8
        %s1179 = scalar_lea.vmem [#allocation7], %s1178
        // Predicated region
        $region53: #{tpu_custom_call.1} parent=43 // pred_check
          %p1180 = pneg %p185
        $region54: #{tpu_custom_call.1} parent=43 // pred_check_branch
          %1182 = sbr.rel (%p1180) target = $region56
        $region55: #{tpu_custom_call.1} parent=43 // pred_region
          %s1184 = ssub.s32 128, 128
          %1185 = vsyncadd %s1176, %s1184
          %s1186 = smul.addr %s26, 128
          %s1187 = scalar_lea.hbm %s6, %s1186
          %s1189 = sshll.u32 %s1179, 4
          %s1190 = int_to_ptr.vmem [resolvable:$true] %s1189
          %1192 = dma.vmem_to_hbm [thread:$0]  %s1190, 128, %s1187, %s1176
        $region56: #{tpu_custom_call.1} parent=43 // pred_fallthru
          _
      $region44: #{tpu_custom_call.1} parent=5 // pred_fallthru
        _
      %p1193 = scmp.le.s32.totalorder 2, %s21
      // Predicated region
      $region57: #{tpu_custom_call.1} parent=5 // pred_check
        %p1194 = pneg %p1193
      $region58: #{tpu_custom_call.1} parent=5 // pred_check_branch
        %1196 = sbr.rel (%p1194) target = $region60
      $region59: #{tpu_custom_call.1} parent=5 // pred_region
        %s1197 = ssub.s32 %s21, 2
        // Predicated region
        $region61: #{tpu_custom_call.1} parent=59 // pred_check
          %p1198 = pneg %p191
        $region62: #{tpu_custom_call.1} parent=59 // pred_check_branch
          %1200 = sbr.rel (%p1198) target = $region64
        $region63: #{tpu_custom_call.1} parent=59 // pred_region
          %s1201 = sand.u32 %s176, 1
          %s1202 = scalar_lea.sflag [#allocation4], %s1201
          %s1203 = sand.u32 %s176, 1
          %s1204 = smul.addr %s1203, 8
          %s1205 = scalar_lea.vmem [#allocation7], %s1204
          %1206 = dma.done %s1202, 128
        $region64: #{tpu_custom_call.1} parent=59 // pred_fallthru
          _
      $region60: #{tpu_custom_call.1} parent=5 // pred_fallthru
        _
    $region6: #{tpu_custom_call.1} parent=1 // loop_footer
      %s25 = sadd.s32 1, %s21
    $region7: #{tpu_custom_call.1} parent=1 // loop_footer_branch
      %20 = sbr.rel target = $region3
    $region8: #{tpu_custom_call.1} parent=1 // loop_exit
      _
    %1207 = vsyncpa [#allocation3], 1
    %s1208 = scalar_lea.sflag [#allocation3], 1
    %1209 = vsyncpa %s1208, 1
    %1210 = vsyncpa [#allocation6], 1
    %s1211 = scalar_lea.sflag [#allocation6], 1
    %1212 = vsyncpa %s1211, 1
    %1213 = vsyncpa [#allocation4], 1
    %s1214 = scalar_lea.sflag [#allocation4], 1
    %1215 = vsyncpa %s1214, 1

</llo_original>
